<compile_context>
chip_gen: v7x
topology: tpu7x:2x2x1
jax: 0.10.0
libtpu: 0.0.40
codegen_flags: <defaults>
</compile_context>

<pallas_src>
import functools

import jax
import jax.numpy as jnp
from jax import lax
from jax.experimental import pallas as pl
from jax.experimental.pallas import tpu as pltpu


def _ffl_kernel(recon_ref, real_ref, o_ref, *, alpha, log_matrix,
                block_rows, n_rows, mask_rows):
    xr = recon_ref[...].astype(jnp.float32)        # (bt, 2*HW) re/im interleaved
    xt = real_ref[...].astype(jnp.float32)
    d = xr - xt
    d2 = d * d

    # Pair each re^2 with its neighbouring im^2: shift by (L-1) == -1, so at
    # even lanes pair = re^2 + im^2 = |recon - real|^2; odd lanes hold garbage.
    lanes = d2.shape[-1]
    pair = d2 + pltpu.roll(d2, shift=lanes - 1, axis=1)

    lane_id = lax.broadcasted_iota(jnp.int32, d2.shape, dimension=1)
    keep = (lane_id & 1) == 0
    if mask_rows:                                   # ragged tail block: drop OOB rows
        row_id = lax.broadcasted_iota(jnp.int32, d2.shape, dimension=0)
        row_id = row_id + pl.program_id(0) * block_rows
        keep = jnp.logical_and(keep, row_id < n_rows)
    fd = jnp.where(keep, pair, 0.0)                 # valid only at even lanes

    if alpha == 1.0 and not log_matrix:
        # sqrt is monotone: max(m) == sqrt(max(fd)); divide via EUP rsqrt.
        slab_max = jnp.max(fd, axis=-1, keepdims=True)      # per-(b,c,p) max
        w = jnp.sqrt(fd) * lax.rsqrt(slab_max)
    else:
        m = jnp.sqrt(fd) ** alpha
        if log_matrix:
            m = jnp.log(m + 1.0)
        m = jnp.where(keep, m, 0.0)
        slab_max = jnp.max(m, axis=-1, keepdims=True)
        w = m / slab_max
    w = jnp.where(jnp.isnan(w), jnp.float32(0.0), w)        # 0/0 -> 0 (torch fixup)
    w = jnp.clip(w, 0.0, 1.0)

    # Masked lanes/rows have fd == 0 and contribute exactly 0 to the sum.
    block_sum = jnp.sum(w * fd)
    o_ref[...] = jnp.broadcast_to(block_sum, o_ref.shape).astype(jnp.float32)


def _vmem_capacity_bytes():
    try:
        cap = int(pltpu.get_tpu_info().vmem_capacity_bytes)
        if cap > 0:
            return cap
    except Exception:
        pass
    return 64 * 1024 * 1024      # v7x-sized fallback: safe on every generation


def _choose_block_rows(n, lanes, itemsize, sub, budget_bytes):
    """Rows per block: biggest tile the VMEM budget allows, a multiple of the
    dtype sublane packing, aiming for >=4 blocks (DMA pipeline overlap + both
    v7x TensorCores) when the problem is big enough."""
    lanes_pad = -(-lanes // 128) * 128               # VMEM lane tiling
    # Per slab row: 2 inputs x 2 DMA buffers (native dtype) + ~8 block-sized
    # f32 temporaries (xr, xt, d, d2, roll, fd, w, iota/mask).
    per_row = lanes_pad * (4 * itemsize + 8 * 4)
    max_rows = max(sub, (budget_bytes // per_row) // sub * sub)
    if n <= max_rows:
        nb = min(4, -(-n // sub))
    else:
        nb = -(-n // max_rows)
    if nb <= 1:
        return n                  # single block spanning the full row axis (always legal)
    rows = -(-n // nb)
    return -(-rows // sub) * sub  # ceil(n/nb) rounded up to the packing multiple


def focal_frequency_loss_pallas(recon_freq, real_freq, *, alpha=1.0,
                                log_matrix=False, batch_matrix=False,
                                matrix=None):
    """Pallas implementation of FocalFrequencyLoss.forward. Returns a scalar f32."""
    if matrix is not None:
        # TODO(synk): precomputed weight-matrix path (matrix is not None) not implemented.
        raise NotImplementedError("matrix != None path is not implemented")
    if batch_matrix:
        # TODO(synk): batch_matrix=True needs a global max over the whole batch (two-pass).
        raise NotImplementedError("batch_matrix=True is not implemented")

    assert recon_freq.shape == real_freq.shape, (recon_freq.shape, real_freq.shape)
    assert recon_freq.ndim == 6 and recon_freq.shape[-1] == 2, recon_freq.shape
    b, c, p, h, w, _ = recon_freq.shape
    n = b * c * p
    hw = h * w
    lanes = 2 * hw

    # Zero-cost contiguous reshape (no transpose copy): re/im interleaved on lanes.
    recon2 = recon_freq.reshape(n, lanes)
    real2 = real_freq.reshape(n, lanes)

    itemsize = jnp.dtype(recon_freq.dtype).itemsize
    sub = max(8, 32 // itemsize)                 # sublane packing: 8 f32 / 16 bf16 / 32 int8

    # Generation-aware VMEM budget: 48 MiB on v7x (64 MiB physical),
    # 96 MiB on v5e/v6e (128 MiB physical).
    vmem_cap = _vmem_capacity_bytes()
    vmem_limit = max(32 << 20, min((vmem_cap * 3) // 4, 96 << 20))
    budget = vmem_limit - (8 << 20)              # headroom: output bufs + compiler scratch

    bt = _choose_block_rows(n, lanes, itemsize, sub, budget)
    nb = -(-n // bt)                             # grid size; tail block masked in-kernel
    mask_rows = (nb * bt != n)

    kernel = functools.partial(
        _ffl_kernel, alpha=float(alpha), log_matrix=bool(log_matrix),
        block_rows=bt, n_rows=n, mask_rows=mask_rows)

    partials = pl.pallas_call(
        kernel,
        out_shape=jax.ShapeDtypeStruct((nb, 8, 128), jnp.float32),
        grid_spec=pltpu.PrefetchScalarGridSpec(
            num_scalar_prefetch=0,
            grid=(nb,),
            in_specs=[
                pl.BlockSpec((bt, lanes), lambda i: (i, 0)),
                pl.BlockSpec((bt, lanes), lambda i: (i, 0)),
            ],
            out_specs=pl.BlockSpec((1, 8, 128), lambda i: (i, 0, 0)),
        ),
        compiler_params=pltpu.CompilerParams(
            dimension_semantics=("parallel",),
            vmem_limit_bytes=vmem_limit,
        ),
    )(recon2, real2)

    # One partial sum per block (broadcast over its (8,128) tile). torch.mean
    # divides by the true element count, which also makes tail masking inert.
    return jnp.sum(partials[:, 0, 0]) / jnp.float32(n * hw)


def _ffl_ref(recon_freq, real_freq, alpha=1.0, log_matrix=False, batch_matrix=False):
    """Pure-JAX reference matching the PyTorch module (matrix=None path)."""
    recon = recon_freq.astype(jnp.float32)
    real = real_freq.astype(jnp.float32)
    tmp = (recon - real) ** 2
    fd = tmp[..., 0] + tmp[..., 1]
    m = jnp.sqrt(fd) ** alpha
    if log_matrix:
        m = jnp.log(m + 1.0)
    if batch_matrix:
        m = m / jnp.max(m)
    else:
        m = m / jnp.max(m, axis=(-2, -1), keepdims=True)
    m = jnp.where(jnp.isnan(m), 0.0, m)
    m = jnp.clip(m, 0.0, 1.0)
    return jnp.mean(m * fd)


if __name__ == "__main__":
    key = jax.random.PRNGKey(0)
    k1, k2 = jax.random.split(key)

    # (B, C, patch_factor**2, H, W, 2) frequency tensors (patch_factor=1).
    shape = (2, 4, 1, 16, 16, 2)
    recon_freq = jax.random.normal(k1, shape, dtype=jnp.float32)
    real_freq = jax.random.normal(k2, shape, dtype=jnp.float32)

    loss = focal_frequency_loss_pallas(recon_freq, real_freq)
    jax.block_until_ready(loss)

    ref = _ffl_ref(recon_freq, real_freq)
    assert jnp.allclose(loss, ref, rtol=1e-5, atol=1e-6), (loss, ref)

    print("KERNEL_OK")
</pallas_src>

<mosaic_0001>
module attributes {stable_mosaic.version = 11 : i64} {
  func.func @_ffl_kernel(%arg0: i32, %arg1: memref<8x512xf32, #tpu.memory_space<vmem>>, %arg2: memref<8x512xf32, #tpu.memory_space<vmem>>, %arg3: memref<1x8x128xf32, #tpu.memory_space<vmem>>) attributes {dimension_semantics = [#tpu.dimension_semantics<parallel>], iteration_bounds = array<i64: 1>, scalar_prefetch = 0 : i64, scratch_operands = 0 : i64, tpu.core_type = #tpu.core_type<tc>, window_params = [{transform_indices = @transform_0, window_bounds = array<i64: 8, 512>}, {transform_indices = @transform_1, window_bounds = array<i64: 8, 512>}, {transform_indices = @transform_2, window_bounds = array<i64: 1, 8, 128>}]} {
    %c0 = arith.constant 0 : index
    %c0_0 = arith.constant 0 : index
    %0 = vector.load %arg1[%c0, %c0_0] : memref<8x512xf32, #tpu.memory_space<vmem>>, vector<8x512xf32>
    %c0_1 = arith.constant 0 : index
    %c0_2 = arith.constant 0 : index
    %1 = vector.load %arg2[%c0_1, %c0_2] : memref<8x512xf32, #tpu.memory_space<vmem>>, vector<8x512xf32>
    %2 = arith.subf %0, %1 : vector<8x512xf32>
    %3 = arith.mulf %2, %2 : vector<8x512xf32>
    %c511_i32 = arith.constant 511 : i32
    %4 = tpu.dynamic_rotate %3 by %c511_i32 dim 1 : vector<8x512xf32>, i32 -> vector<8x512xf32>
    %5 = arith.addf %3, %4 : vector<8x512xf32>
    %6 = tpu.iota {dimensions = array<i32: 1>} : vector<8x512xi32>
    %c1_i32 = arith.constant 1 : i32
    %7 = vector.broadcast %c1_i32 : i32 to vector<8x512xi32>
    %8 = arith.andi %6, %7 : vector<8x512xi32>
    %c0_i32 = arith.constant 0 : i32
    %9 = vector.broadcast %c0_i32 : i32 to vector<8x512xi32>
    %10 = arith.cmpi eq, %8, %9 : vector<8x512xi32>
    %cst = arith.constant 0.000000e+00 : f32
    %11 = vector.broadcast %cst : f32 to vector<8x512xf32>
    %12 = arith.select %10, %5, %11 : vector<8x512xi1>, vector<8x512xf32>
    %cst_3 = arith.constant dense<0xFF800000> : vector<8xf32>
    %13 = vector.multi_reduction <maximumf>, %12, %cst_3 [1] : vector<8x512xf32> to vector<8xf32>
    %14 = vector.shape_cast %13 : vector<8xf32> to vector<8x1xf32>
    %15 = math.sqrt %12 : vector<8x512xf32>
    %16 = math.rsqrt %14 : vector<8x1xf32>
    %17 = vector.broadcast %16 : vector<8x1xf32> to vector<8x512xf32>
    %18 = arith.mulf %15, %17 : vector<8x512xf32>
    %19 = arith.cmpf one, %18, %18 : vector<8x512xf32>
    %cst_4 = arith.constant 0.000000e+00 : f32
    %20 = vector.broadcast %cst_4 : f32 to vector<8x512xf32>
    %21 = arith.select %19, %20, %18 : vector<8x512xi1>, vector<8x512xf32>
    %cst_5 = arith.constant 0.000000e+00 : f32
    %cst_6 = arith.constant 1.000000e+00 : f32
    %22 = vector.broadcast %cst_5 : f32 to vector<8x512xf32>
    %23 = arith.maximumf %22, %21 : vector<8x512xf32>
    %24 = vector.broadcast %cst_6 : f32 to vector<8x512xf32>
    %25 = arith.minimumf %24, %23 : vector<8x512xf32>
    %26 = arith.mulf %25, %12 : vector<8x512xf32>
    %27 = vector.shape_cast %26 : vector<8x512xf32> to vector<1x8x512xf32>
    %cst_7 = arith.constant dense<0.000000e+00> : vector<1xf32>
    %28 = vector.multi_reduction <add>, %27, %cst_7 [1, 2] : vector<1x8x512xf32> to vector<1xf32>
    %29 = vector.shape_cast %28 : vector<1xf32> to vector<1x1x1xf32>
    %30 = vector.extract %29[0, 0, 0] : f32 from vector<1x1x1xf32>
    %31 = vector.broadcast %30 : f32 to vector<1x8x128xf32>
    %c0_8 = arith.constant 0 : index
    %c0_9 = arith.constant 0 : index
    %c0_10 = arith.constant 0 : index
    %32 = vector.load %arg3[%c0_8, %c0_9, %c0_10] : memref<1x8x128xf32, #tpu.memory_space<vmem>>, vector<1x8x128xf32>
    tpu.vector_store %arg3[%c0_8, %c0_9, %c0_10], %31 {strides = array<i32>} : memref<1x8x128xf32, #tpu.memory_space<vmem>>, vector<1x8x128xf32>,
    return
  }
  func.func @transform_0(%arg0: i32) -> (i32, i32) {
    %c0_i32 = arith.constant 0 : i32
    %c0_i32_0 = arith.constant 0 : i32
    return %arg0, %c0_i32 : i32, i32
  }
  func.func @transform_1(%arg0: i32) -> (i32, i32) {
    %c0_i32 = arith.constant 0 : i32
    %c0_i32_0 = arith.constant 0 : i32
    return %arg0, %c0_i32 : i32, i32
  }
  func.func @transform_2(%arg0: i32) -> (i32, i32, i32) {
    %c0_i32 = arith.constant 0 : i32
    %c0_i32_0 = arith.constant 0 : i32
    %c0_i32_1 = arith.constant 0 : i32
    return %arg0, %c0_i32, %c0_i32_0 : i32, i32, i32
  }
}

</mosaic_0001>

<llo_original>
// kernel: tpu_custom_call.1
$region0: #{tpu_custom_call.1}
  #allocation0 [shape = 'u32[]', space=smem, size = 0x4, offset = 0x4, fixed_abs, tag = 'smem constant byte address 0x4 - core index']
  #allocation1 [shape = 'u32[144,128]{1,0:T(1,128)}', space=vmem, size = 0x12000, scoped, tag = 'internal scratch']
  %s0 = inlined_call_operand.hbm [shape: f32[8,512], index: 0, kind: input, shape index: {}]
  %s1 = inlined_call_operand.hbm [shape: f32[8,512], index: 1, kind: input, shape index: {}]
  %s2 = inlined_call_operand.hbm [shape: f32[1,8,128], index: 2, kind: output, shape index: {}]
  %s3 = sld [smem:[#allocation0]]
  $region26: #{tpu_custom_call.1} parent=0
    _
  %s5 = ssub.s32 1, %s3
  %s6 = scalar_select 0, %s5, %s3
  $region1: #{tpu_custom_call.1} parent=0
    #allocation2 [shape = 'u8[16384]{0}', space=vmem, size = 0x4000, scoped, tag = 'input window, operand 0, single buffered']
    #allocation3 [shape = 's32[1]{0}', space=sflag, size = 0x4, scoped, tag = 'scoped memory for tpu_custom_call.1']
    #allocation4 [shape = 's32[1]{0}', space=sflag, size = 0x4, scoped, tag = 'scoped memory for tpu_custom_call.1']
    #allocation5 [shape = 'u8[16384]{0}', space=vmem, size = 0x4000, scoped, tag = 'input window, operand 1, single buffered']
    #allocation6 [shape = 's32[1]{0}', space=sflag, size = 0x4, scoped, tag = 'scoped memory for tpu_custom_call.1']
    #allocation7 [shape = 'u8[4096]{0}', space=vmem, size = 0x1000, scoped, tag = 'output window, operand 0, single buffered']
    %7 = vsyncpa [#allocation3], 0
    %8 = vsyncpa [#allocation6], 0
    %9 = vsyncpa [#allocation4], 0
    // Predicated region
    $region2: #{tpu_custom_call.1} parent=1 // pred_check
      _
    $region3: #{tpu_custom_call.1} parent=1 // pred_check_branch
      %11 = sbr.rel (0) target = $region5
    $region4: #{tpu_custom_call.1} parent=1 // pred_region
      %s13 = ssub.s32 512, 512
      %14 = vsyncadd [#allocation3], %s13
      %s16 = sshll.u32 [#allocation2], 4
      %s17 = int_to_ptr.vmem [resolvable:$true] %s16
      %19 = dma.hbm_to_vmem [thread:$0]  %s0, 512, %s17, [#allocation3]
    $region5: #{tpu_custom_call.1} parent=1 // pred_fallthru
      _
    // Predicated region
    $region6: #{tpu_custom_call.1} parent=1 // pred_check
      _
    $region7: #{tpu_custom_call.1} parent=1 // pred_check_branch
      %21 = sbr.rel (0) target = $region9
    $region8: #{tpu_custom_call.1} parent=1 // pred_region
      %s23 = ssub.s32 512, 512
      %24 = vsyncadd [#allocation6], %s23
      %s26 = sshll.u32 [#allocation5], 4
      %s27 = int_to_ptr.vmem [resolvable:$true] %s26
      %29 = dma.hbm_to_vmem [thread:$0]  %s1, 512, %s27, [#allocation6]
    $region9: #{tpu_custom_call.1} parent=1 // pred_fallthru
      _
    // Predicated region
    $region10: #{tpu_custom_call.1} parent=1 // pred_check
      _
    $region11: #{tpu_custom_call.1} parent=1 // pred_check_branch
      %31 = sbr.rel (0) target = $region13
    $region12: #{tpu_custom_call.1} parent=1 // pred_region
      %32 = dma.done [#allocation3], 512
    $region13: #{tpu_custom_call.1} parent=1 // pred_fallthru
      _
    // Predicated region
    $region14: #{tpu_custom_call.1} parent=1 // pred_check
      _
    $region15: #{tpu_custom_call.1} parent=1 // pred_check_branch
      %34 = sbr.rel (0) target = $region17
    $region16: #{tpu_custom_call.1} parent=1 // pred_region
      %35 = dma.done [#allocation6], 512
    $region17: #{tpu_custom_call.1} parent=1 // pred_fallthru
      _
    %v36 = vld [vmem:[#allocation2] sm:$0xff]
    %v37 = vld [vmem:[#allocation2 + $0x8] sm:$0xff]
    %v38 = vld [vmem:[#allocation2 + $0x10] sm:$0xff]
    %v39 = vld [vmem:[#allocation2 + $0x18] sm:$0xff]
    %v40 = vld [vmem:[#allocation5] sm:$0xff]
    %v41 = vld [vmem:[#allocation5 + $0x8] sm:$0xff]
    %v42 = vld [vmem:[#allocation5 + $0x10] sm:$0xff]
    %v43 = vld [vmem:[#allocation5 + $0x18] sm:$0xff]
    %v44 = vsub.f32 %v36, %v40
    %v45 = vsub.f32 %v37, %v41
    %v46 = vsub.f32 %v38, %v42
    %v47 = vsub.f32 %v39, %v43
    %v48 = vmul.f32 %v44, %v44
    %v49 = vmul.f32 %v45, %v45
    %v50 = vmul.f32 %v46, %v46
    %v51 = vmul.f32 %v47, %v47
    %52 = vrot.lane.b32.xlu0 %v48, 127
    %v53 = vpop.permute.xlu0 %52
    %54 = vrot.lane.b32.xlu0 %v49, 127
    %v55 = vpop.permute.xlu0 %54
    %56 = vrot.lane.b32.xlu0 %v50, 127
    %v57 = vpop.permute.xlu0 %56
    %58 = vrot.lane.b32.xlu0 %v51, 127
    %v59 = vpop.permute.xlu0 %58
    %v60 = vlaneseq
    %v61 = vand.u32 %v60, 127
    %vm62 = vcmp.lt.s32.totalorder %v61, 127
    %v63 = vsel %vm62, %v57, %v59
    %v64 = vsel %vm62, %v55, %v57
    %v65 = vsel %vm62, %v53, %v55
    %v66 = vsel %vm62, %v59, %v53
    %v67 = vadd.f32 %v48, %v65
    %v68 = vadd.f32 %v49, %v64
    %v69 = vadd.f32 %v50, %v63
    %v70 = vadd.f32 %v51, %v66
    %v71 = vadd.s32 %v61, 128
    %v72 = vadd.s32 %v61, 256
    %v73 = vadd.s32 %v61, 384
    %v74 = vand.u32 %v61, 1
    %v75 = vand.u32 %v71, 1
    %v76 = vand.u32 %v72, 1
    %v77 = vand.u32 %v73, 1
    %vm78 = vcmp.eq.s32.totalorder %v74, 0
    %vm79 = vcmp.eq.s32.totalorder %v75, 0
    %vm80 = vcmp.eq.s32.totalorder %v76, 0
    %vm81 = vcmp.eq.s32.totalorder %v77, 0
    %v82 = vsel %vm78, %v67, 0.0
    %v83 = vsel %vm79, %v68, 0.0
    %v84 = vsel %vm80, %v69, 0.0
    %v85 = vsel %vm81, %v70, 0.0
    %v86 = vmax.f32 %v82, %v83
    %v87 = vmax.f32 %v84, %v85
    %v88 = vmax.f32 %v86, %v87
    %89 = vmax.xlane.f32.xlu0 %v88
    %v90 = vpop.xlane.xlu0 %89
    %v91 = vrsqrt.pop %v82
    %v92 = vmul.f32 %v82, %v91
    %vm93 = vcmp.eq.f32.partialorder %v82, inf
    %v94 = vsel %vm93, %v82, %v92
    %vm95 = vcmp.eq.f32.partialorder %v82, 0.0
    %v96 = vand.u32 %v82, 2147483648
    %v97 = vsel %vm95, %v96, %v94
    %v98 = vrsqrt.pop %v83
    %v99 = vmul.f32 %v83, %v98
    %vm100 = vcmp.eq.f32.partialorder %v83, inf
    %v101 = vsel %vm100, %v83, %v99
    %vm102 = vcmp.eq.f32.partialorder %v83, 0.0
    %v103 = vand.u32 %v83, 2147483648
    %v104 = vsel %vm102, %v103, %v101
    %v105 = vrsqrt.pop %v84
    %v106 = vmul.f32 %v84, %v105
    %vm107 = vcmp.eq.f32.partialorder %v84, inf
    %v108 = vsel %vm107, %v84, %v106
    %vm109 = vcmp.eq.f32.partialorder %v84, 0.0
    %v110 = vand.u32 %v84, 2147483648
    %v111 = vsel %vm109, %v110, %v108
    %v112 = vrsqrt.pop %v85
    %v113 = vmul.f32 %v85, %v112
    %vm114 = vcmp.eq.f32.partialorder %v85, inf
    %v115 = vsel %vm114, %v85, %v113
    %vm116 = vcmp.eq.f32.partialorder %v85, 0.0
    %v117 = vand.u32 %v85, 2147483648
    %v118 = vsel %vm116, %v117, %v115
    %v119 = vrsqrt.pop %v90
    %v120 = vmul.f32 %v97, %v119
    %v121 = vmul.f32 %v104, %v119
    %v122 = vmul.f32 %v111, %v119
    %v123 = vmul.f32 %v118, %v119
    %vm124 = vcmp.ne.f32.partialorder %v120, %v120
    %vm125 = vcmp.ne.f32.partialorder %v121, %v121
    %vm126 = vcmp.ne.f32.partialorder %v122, %v122
    %vm127 = vcmp.ne.f32.partialorder %v123, %v123
    %v128 = vsel %vm124, 0.0, %v120
    %v129 = vsel %vm125, 0.0, %v121
    %v130 = vsel %vm126, 0.0, %v122
    %v131 = vsel %vm127, 0.0, %v123
    %v132 = vmax.f32 %v128, 0.0
    %v133 = vmax.f32 %v129, 0.0
    %v134 = vmax.f32 %v130, 0.0
    %v135 = vmax.f32 %v131, 0.0
    %v136 = vmin.f32 %v132, 1.0
    %v137 = vmin.f32 %v133, 1.0
    %v138 = vmin.f32 %v134, 1.0
    %v139 = vmin.f32 %v135, 1.0
    %v140 = vmul.f32 %v136, %v82
    %v141 = vmul.f32 %v137, %v83
    %v142 = vmul.f32 %v138, %v84
    %v143 = vmul.f32 %v139, %v85
    %v144 = vadd.f32 %v140, %v141
    %v145 = vadd.f32 %v144, %v142
    %v146 = vadd.f32 %v145, %v143
    %147 = vadd.xlane.f32.xlu0 %v146
    %v148 = vpop.xlane.xlu0 %147
    %v149 = vrot.slane %v148, 4
    %v150 = vadd.f32 %v148, %v149
    %v151 = vrot.slane %v150, 2
    %v152 = vadd.f32 %v150, %v151
    %v153 = vrot.slane %v152, 1
    %v154 = vadd.f32 %v152, %v153
    %s155 = vtos %v154
    %v156 = vstv %s155
    %157 = vst [vmem:[#allocation7] sm:$0xff] %v156
    // Predicated region
    $region18: #{tpu_custom_call.1} parent=1 // pred_check
      _
    $region19: #{tpu_custom_call.1} parent=1 // pred_check_branch
      %159 = sbr.rel (0) target = $region21
    $region20: #{tpu_custom_call.1} parent=1 // pred_region
      %s161 = ssub.s32 128, 128
      %162 = vsyncadd [#allocation4], %s161
      %s164 = sshll.u32 [#allocation7], 4
      %s165 = int_to_ptr.vmem [resolvable:$true] %s164
      %167 = dma.vmem_to_hbm [thread:$0]  %s165, 128, %s2, [#allocation4]
    $region21: #{tpu_custom_call.1} parent=1 // pred_fallthru
      _
    // Predicated region
    $region22: #{tpu_custom_call.1} parent=1 // pred_check
      _
    $region23: #{tpu_custom_call.1} parent=1 // pred_check_branch
      %169 = sbr.rel (0) target = $region25
    $region24: #{tpu_custom_call.1} parent=1 // pred_region
      %170 = dma.done [#allocation4], 128
    $region25: #{tpu_custom_call.1} parent=1 // pred_fallthru
      _
    %171 = vsyncpa [#allocation3], 1
    %172 = vsyncpa [#allocation6], 1
    %173 = vsyncpa [#allocation4], 1

</llo_original>
